<compile_context>
chip_gen: v7x
topology: tpu7x:2x2x1
jax: 0.10.0
libtpu: 0.0.40
codegen_flags: <defaults>
</compile_context>

<pallas_src>
import jax
import jax.numpy as jnp
from jax import lax
from jax.experimental import pallas as pl
from jax.experimental.pallas import tpu as pltpu

CP = 128  # conv out-channels padded to one full 128-lane tile


def _cte_kernel(x_ref, w_ref, b_ref, wp_ref, bp_ref, out_ref):
    """Fused conv3x3 + BN(eval) + ReLU + maxpool2x2 + 1x1-conv for one row tile.

    x_ref  : (T, 48)      bf16, packed 4x4 patch per token, channel (oy*4+ox)*Cin + c
    w_ref  : (48, 4*128)  bf16, per-pool-phase conv weights (BN scale folded, Cout padded)
    b_ref  : (1, 128)     f32,  folded BN bias (zero-padded)
    wp_ref : (128, Demb)  bf16, 1x1 projection weight (rows zero-padded)
    bp_ref : (1, Demb)    f32,  1x1 projection bias
    out_ref: (T, Demb)    f32
    """
    cp = b_ref.shape[-1]  # 128 (padded Cout)

    # One MXU push: all 4 maxpool phases as 128-lane-aligned column blocks (f32 acc).
    acc = jnp.dot(x_ref[...], w_ref[...],
                  preferred_element_type=jnp.float32)            # (T, 4*cp)

    # Maxpool over the 4 phases = cheap VPU max of aligned lane slices (f32).
    pooled = jnp.maximum(
        jnp.maximum(acc[:, 0 * cp:1 * cp], acc[:, 1 * cp:2 * cp]),
        jnp.maximum(acc[:, 2 * cp:3 * cp], acc[:, 3 * cp:4 * cp]))

    # BN bias + ReLU (scale already folded into w_ref; max/bias/relu commute).
    z = jnp.maximum(pooled + b_ref[...], 0.0)                     # (T, 128) f32

    # 1x1 projection (bf16 operands, f32 accumulation).
    tok = jnp.dot(z.astype(wp_ref.dtype), wp_ref[...],
                  preferred_element_type=jnp.float32) + bp_ref[...]
    out_ref[...] = tok.astype(out_ref.dtype)


def prepare_cte_params(w3_hwio, gamma, beta, run_mean, run_var, wp, bp, eps=1e-5):
    """Fold BN(eval) into the conv weights and pack the per-phase weight slabs.

    Hoisted off the per-forward path: call once per weight update and reuse.
    """
    Cin, Cout = w3_hwio.shape[2], w3_hwio.shape[3]
    Demb = wp.shape[-1]
    assert Cout <= CP
    f32 = jnp.float32

    inv_std = 1.0 / jnp.sqrt(run_var.astype(f32) + eps)
    scale = gamma.astype(f32) * inv_std
    bias = beta.astype(f32) - run_mean.astype(f32) * scale
    w3s = w3_hwio.astype(f32) * scale                              # (3,3,Cin,Cout)

    # Per maxpool phase (a,b): place the 3x3 taps at offsets (a+dy, b+dx) inside the
    # token's 4x4 input patch, flatten to rows, pad Cout -> 128 lanes. 4 pads + concat
    # (no scatter chain).
    blocks = []
    for a in (0, 1):
        for b in (0, 1):
            wpad = jnp.pad(w3s, ((a, 1 - a), (b, 1 - b), (0, 0), (0, 0)))  # (4,4,Cin,Cout)
            blocks.append(jnp.pad(wpad.reshape(16 * Cin, Cout),
                                  ((0, 0), (0, CP - Cout))))
    w_big = jnp.concatenate(blocks, axis=1).astype(jnp.bfloat16)    # (16*Cin, 4*CP)

    bias_pad = jnp.pad(bias.reshape(1, Cout), ((0, 0), (0, CP - Cout)))              # f32
    wp_pad = jnp.pad(wp.astype(f32), ((0, CP - Cout), (0, 0))).astype(jnp.bfloat16)  # (CP, Demb)
    bp2 = bp.reshape(1, Demb).astype(f32)

    return dict(w_big=w_big, bias_pad=bias_pad, wp_pad=wp_pad, bp2=bp2,
                cin=Cin, cout=Cout, demb=Demb)


def cte_block_forward(x_nchw, params, *, tile_t=2048, min_grid_steps=4):
    """Pallas implementation of CTEBlock.forward. Returns (tokens, H', W')."""
    B, Cin, H, W = x_nchw.shape
    assert Cin == params["cin"] and H % 2 == 0 and W % 2 == 0
    Hp, Wp = H // 2, W // 2
    n_tok = Hp * Wp
    Demb = params["demb"]

    # ---- host glue: NCHW -> NHWC (bf16), pad, pack the 16 stride-2 phase views ----
    # TODO(synk): at production H*W this slab is ~4x the input in HBM; eliminate via
    # in-kernel halo DMA (memory_space=pl.ANY). Negligible for small activations.
    x = jnp.transpose(x_nchw, (0, 2, 3, 1)).astype(jnp.bfloat16)   # (B, H, W, Cin)
    x_pad = jnp.pad(x, ((0, 0), (1, 1), (1, 1), (0, 0)))           # (B, H+2, W+2, Cin)
    cols = [x_pad[:, oy:oy + 2 * Hp:2, ox:ox + 2 * Wp:2, :]
            for oy in range(4) for ox in range(4)]
    xs = jnp.concatenate(cols, axis=-1).reshape(B * n_tok, 16 * Cin)  # (B*N, 48) bf16

    # ---- row tiling: large tiles (mem-bound), but keep >= min_grid_steps grid steps
    # so v7x's 2 TensorCores both get work; 16-row alignment for bf16 sublanes. -------
    n_rows = B * n_tok

    def r16(v):
        return max(16, ((v + 15) // 16) * 16)

    tile = min(tile_t, r16(-(-n_rows // min_grid_steps)), r16(n_rows))
    n_rows_pad = -(-n_rows // tile) * tile
    if n_rows_pad != n_rows:
        xs = jnp.pad(xs, ((0, n_rows_pad - n_rows), (0, 0)))
    grid = (n_rows_pad // tile,)

    w_big, bias_pad, wp_pad, bp2 = (params["w_big"], params["bias_pad"],
                                    params["wp_pad"], params["bp2"])

    tokens = pl.pallas_call(
        _cte_kernel,
        out_shape=jax.ShapeDtypeStruct((n_rows_pad, Demb), jnp.float32),
        grid_spec=pltpu.PrefetchScalarGridSpec(
            num_scalar_prefetch=0,
            grid=grid,
            in_specs=[
                pl.BlockSpec((tile, xs.shape[1]), lambda t: (t, 0)),
                # Constant index maps: blocks stay resident across grid steps (no re-DMA).
                pl.BlockSpec(w_big.shape, lambda t: (0, 0)),
                pl.BlockSpec(bias_pad.shape, lambda t: (0, 0)),
                pl.BlockSpec(wp_pad.shape, lambda t: (0, 0)),
                pl.BlockSpec(bp2.shape, lambda t: (0, 0)),
            ],
            out_specs=pl.BlockSpec((tile, Demb), lambda t: (t, 0)),
        ),
        compiler_params=pltpu.CompilerParams(
            dimension_semantics=("parallel",),
            vmem_limit_bytes=32 * 1024 * 1024),
    )(xs, w_big, bias_pad, wp_pad, bp2)

    # Padded rows are garbage and must never be consumed downstream; slice them off here.
    tokens = tokens[:n_rows].reshape(B, n_tok, Demb)
    return tokens, Hp, Wp


def _reference(x_nchw, w3_hwio, gamma, beta, run_mean, run_var, wp, bp, eps=1e-5):
    """Plain-JAX f32 reference mirroring the PyTorch forward (BN in eval mode)."""
    x = jnp.transpose(x_nchw, (0, 2, 3, 1))
    y = lax.conv_general_dilated(
        x, w3_hwio, window_strides=(1, 1), padding=((1, 1), (1, 1)),
        dimension_numbers=("NHWC", "HWIO", "NHWC"),
        precision=lax.Precision.HIGHEST)
    y = (y - run_mean) / jnp.sqrt(run_var + eps) * gamma + beta
    y = jnp.maximum(y, 0.0)
    y = lax.reduce_window(y, -jnp.inf, lax.max,
                          window_dimensions=(1, 2, 2, 1),
                          window_strides=(1, 2, 2, 1),
                          padding="VALID")
    y = jnp.einsum("bhwc,cd->bhwd", y, wp,
                   precision=lax.Precision.HIGHEST) + bp
    B, Hp, Wp, D = y.shape
    return y.reshape(B, Hp * Wp, D), Hp, Wp


if __name__ == "__main__":
    key = jax.random.PRNGKey(0)
    ks = jax.random.split(key, 8)

    B, Cin, H, W = 2, 3, 16, 16
    Cout, Demb = 64, 128

    x = jax.random.normal(ks[0], (B, Cin, H, W), jnp.float32)
    w3_hwio = jax.random.normal(ks[1], (3, 3, Cin, Cout), jnp.float32) * 0.1
    gamma = jax.random.uniform(ks[2], (Cout,), jnp.float32, 0.5, 1.5)
    beta = jax.random.normal(ks[3], (Cout,), jnp.float32) * 0.1
    run_mean = jax.random.normal(ks[4], (Cout,), jnp.float32) * 0.1
    run_var = jax.random.uniform(ks[5], (Cout,), jnp.float32, 0.5, 1.5)
    wp = jax.random.normal(ks[6], (Cout, Demb), jnp.float32) * 0.1
    bp = jax.random.normal(ks[7], (Demb,), jnp.float32) * 0.1

    # Weight folding is done once (hoisted off the forward path).
    params = prepare_cte_params(w3_hwio, gamma, beta, run_mean, run_var, wp, bp)
    params = jax.tree_util.tree_map(
        lambda a: jax.block_until_ready(a) if isinstance(a, jax.Array) else a, params)

    tokens, Hp, Wp = cte_block_forward(x, params)
    jax.block_until_ready(tokens)

    ref, Hp_r, Wp_r = _reference(
        x, w3_hwio, gamma, beta, run_mean, run_var, wp, bp)

    assert tokens.shape == (B, Hp * Wp, Demb) == ref.shape, tokens.shape
    assert (Hp, Wp) == (Hp_r, Wp_r) == (H // 2, W // 2)
    # bf16 activations/weights (f32 accumulation) -> loosened tolerance vs f32 reference.
    err = float(jnp.max(jnp.abs(tokens - ref)))
    ref_max = float(jnp.max(jnp.abs(ref)))
    assert err <= 0.05 + 0.03 * ref_max, f"max abs error too large: {err} (ref_max={ref_max})"

    print("KERNEL_OK")
</pallas_src>

<mosaic_0001>
module attributes {stable_mosaic.version = 11 : i64} {
  func.func @_cte_kernel(%arg0: i32, %arg1: memref<32x48xbf16, #tpu.memory_space<vmem>>, %arg2: memref<48x512xbf16, #tpu.memory_space<vmem>>, %arg3: memref<1x128xf32, #tpu.memory_space<vmem>>, %arg4: memref<128x128xbf16, #tpu.memory_space<vmem>>, %arg5: memref<1x128xf32, #tpu.memory_space<vmem>>, %arg6: memref<32x128xf32, #tpu.memory_space<vmem>>) attributes {dimension_semantics = [#tpu.dimension_semantics<parallel>], iteration_bounds = array<i64: 4>, scalar_prefetch = 0 : i64, scratch_operands = 0 : i64, tpu.core_type = #tpu.core_type<tc>, window_params = [{transform_indices = @transform_0, window_bounds = array<i64: 32, 48>}, {pipeline_mode = #tpu.pipeline_mode<synchronous>, transform_indices = @transform_1, window_bounds = array<i64: 48, 512>}, {pipeline_mode = #tpu.pipeline_mode<synchronous>, transform_indices = @transform_2, window_bounds = array<i64: 1, 128>}, {pipeline_mode = #tpu.pipeline_mode<synchronous>, transform_indices = @transform_3, window_bounds = array<i64: 128, 128>}, {pipeline_mode = #tpu.pipeline_mode<synchronous>, transform_indices = @transform_4, window_bounds = array<i64: 1, 128>}, {transform_indices = @transform_5, window_bounds = array<i64: 32, 128>}]} {
    %c0 = arith.constant 0 : index
    %c0_0 = arith.constant 0 : index
    %0 = vector.load %arg1[%c0, %c0_0] : memref<32x48xbf16, #tpu.memory_space<vmem>>, vector<32x48xbf16>
    %c0_1 = arith.constant 0 : index
    %c0_2 = arith.constant 0 : index
    %1 = vector.load %arg2[%c0_1, %c0_2] : memref<48x512xbf16, #tpu.memory_space<vmem>>, vector<48x512xbf16>
    %cst = arith.constant dense<0.000000e+00> : vector<32x512xf32>
    %2 = tpu.matmul %0, %1, %cst {dimension_numbers = #tpu.dot_dimension_numbers<[1], [0], [0], [1], [0, 0, 1, 1], [], []>} : vector<32x48xbf16>, vector<48x512xbf16>, vector<32x512xf32> -> vector<32x512xf32>
    %3 = vector.extract_strided_slice %2 {offsets = [0, 0], sizes = [32, 128], strides = [1, 1]} : vector<32x512xf32> to vector<32x128xf32>
    %4 = vector.extract_strided_slice %2 {offsets = [0, 128], sizes = [32, 128], strides = [1, 1]} : vector<32x512xf32> to vector<32x128xf32>
    %5 = arith.maximumf %3, %4 : vector<32x128xf32>
    %6 = vector.extract_strided_slice %2 {offsets = [0, 256], sizes = [32, 128], strides = [1, 1]} : vector<32x512xf32> to vector<32x128xf32>
    %7 = vector.extract_strided_slice %2 {offsets = [0, 384], sizes = [32, 128], strides = [1, 1]} : vector<32x512xf32> to vector<32x128xf32>
    %8 = arith.maximumf %6, %7 : vector<32x128xf32>
    %9 = arith.maximumf %5, %8 : vector<32x128xf32>
    %c0_3 = arith.constant 0 : index
    %c0_4 = arith.constant 0 : index
    %10 = vector.load %arg3[%c0_3, %c0_4] : memref<1x128xf32, #tpu.memory_space<vmem>>, vector<1x128xf32>
    %11 = vector.broadcast %10 : vector<1x128xf32> to vector<32x128xf32>
    %12 = arith.addf %9, %11 : vector<32x128xf32>
    %cst_5 = arith.constant 0.000000e+00 : f32
    %13 = vector.broadcast %cst_5 : f32 to vector<32x128xf32>
    %14 = arith.maximumf %12, %13 : vector<32x128xf32>
    %15 = arith.truncf %14 : vector<32x128xf32> to vector<32x128xbf16>
    %c0_6 = arith.constant 0 : index
    %c0_7 = arith.constant 0 : index
    %16 = vector.load %arg4[%c0_6, %c0_7] : memref<128x128xbf16, #tpu.memory_space<vmem>>, vector<128x128xbf16>
    %cst_8 = arith.constant dense<0.000000e+00> : vector<32x128xf32>
    %17 = tpu.matmul %15, %16, %cst_8 {dimension_numbers = #tpu.dot_dimension_numbers<[1], [0], [0], [1], [0, 0, 1, 1], [], []>} : vector<32x128xbf16>, vector<128x128xbf16>, vector<32x128xf32> -> vector<32x128xf32>
    %c0_9 = arith.constant 0 : index
    %c0_10 = arith.constant 0 : index
    %18 = vector.load %arg5[%c0_9, %c0_10] : memref<1x128xf32, #tpu.memory_space<vmem>>, vector<1x128xf32>
    %19 = vector.broadcast %18 : vector<1x128xf32> to vector<32x128xf32>
    %20 = arith.addf %17, %19 : vector<32x128xf32>
    %c0_11 = arith.constant 0 : index
    %c0_12 = arith.constant 0 : index
    %21 = vector.load %arg6[%c0_11, %c0_12] : memref<32x128xf32, #tpu.memory_space<vmem>>, vector<32x128xf32>
    tpu.vector_store %arg6[%c0_11, %c0_12], %20 {strides = array<i32>} : memref<32x128xf32, #tpu.memory_space<vmem>>, vector<32x128xf32>,
    return
  }
  func.func @transform_0(%arg0: i32) -> (i32, i32) {
    %c0_i32 = arith.constant 0 : i32
    %c0_i32_0 = arith.constant 0 : i32
    return %arg0, %c0_i32 : i32, i32
  }
  func.func @transform_1(%arg0: i32) -> (i32, i32) {
    %c0_i32 = arith.constant 0 : i32
    %c0_i32_0 = arith.constant 0 : i32
    %c0_i32_1 = arith.constant 0 : i32
    return %c0_i32, %c0_i32_0 : i32, i32
  }
  func.func @transform_2(%arg0: i32) -> (i32, i32) {
    %c0_i32 = arith.constant 0 : i32
    %c0_i32_0 = arith.constant 0 : i32
    %c0_i32_1 = arith.constant 0 : i32
    return %c0_i32, %c0_i32_0 : i32, i32
  }
  func.func @transform_3(%arg0: i32) -> (i32, i32) {
    %c0_i32 = arith.constant 0 : i32
    %c0_i32_0 = arith.constant 0 : i32
    %c0_i32_1 = arith.constant 0 : i32
    return %c0_i32, %c0_i32_0 : i32, i32
  }
  func.func @transform_4(%arg0: i32) -> (i32, i32) {
    %c0_i32 = arith.constant 0 : i32
    %c0_i32_0 = arith.constant 0 : i32
    %c0_i32_1 = arith.constant 0 : i32
    return %c0_i32, %c0_i32_0 : i32, i32
  }
  func.func @transform_5(%arg0: i32) -> (i32, i32) {
    %c0_i32 = arith.constant 0 : i32
    %c0_i32_0 = arith.constant 0 : i32
    return %arg0, %c0_i32 : i32, i32
  }
}

</mosaic_0001>

<llo_original>
// kernel: tpu_custom_call.1
$region0: #{tpu_custom_call.1}
  #allocation0 [shape = 'u32[]', space=smem, size = 0x4, offset = 0x4, fixed_abs, tag = 'smem constant byte address 0x4 - core index']
  #allocation1 [shape = 'u32[144,128]{1,0:T(1,128)}', space=vmem, size = 0x12000, scoped, tag = 'internal scratch']
  %s0 = inlined_call_operand.vmem [shape: bf16[128,48], index: 0, kind: input, shape index: {}]
  %s1 = inlined_call_operand.hbm [shape: bf16[48,512], index: 1, kind: input, shape index: {}]
  %s2 = inlined_call_operand.vmem [shape: f32[1,128], index: 2, kind: input, shape index: {}]
  %s3 = inlined_call_operand.vmem [shape: bf16[128,128], index: 3, kind: input, shape index: {}]
  %s4 = inlined_call_operand.vmem [shape: f32[1,128], index: 4, kind: input, shape index: {}]
  %s5 = inlined_call_operand.hbm [shape: f32[128,128], index: 5, kind: output, shape index: {}]
  %s6 = sld [smem:[#allocation0]]
  $region57: #{tpu_custom_call.1} parent=0
    _
  %s8 = ssub.s32 1, %s6
  %s9 = scalar_select 0, %s8, %s6
  $region1: #{tpu_custom_call.1} parent=0
    #allocation2 [shape = 'u8[49152]{0}', space=vmem, size = 0xc000, scoped, tag = 'input window, operand 1, single buffered']
    #allocation3 [shape = 's32[2]{0}', space=sflag, size = 0x8, scoped, tag = 'scoped memory for tpu_custom_call.1']
    #allocation4 [shape = 's32[2]{0}', space=sflag, size = 0x8, scoped, tag = 'scoped memory for tpu_custom_call.1']
    #allocation5 [shape = 'u8[32768]{0}', space=vmem, size = 0x8000, scoped, tag = 'output window, operand 0']
    %10 = vsyncpa [#allocation3], 0
    %11 = vsyncpa [#allocation4], 0
    %s12 = scalar_lea.sflag [#allocation4], 1
    %13 = vsyncpa %s12, 0
    loop: start=0, step=1, limit=6
    $region2: #{tpu_custom_call.1} parent=1 // loop_pre_header
      _
    $region3: #{tpu_custom_call.1} parent=1 // loop_header
      %s15 = sphi 0, %s19
      %p16 = scmp.ge.s32.totalorder %s15, 6
      %s25 = sphi 0, %s27
      %s28 = sphi 0, %s25
      %s29 = sphi 0, %s28
      %s45 = sphi 0, %s29
      %s49 = sphi 0, %s49
      %s51 = sphi 0, %s49
      %s52 = sphi 0, %s51
      %s66 = sphi 0, %s52
      %s70 = sphi 0, %s70
      %s72 = sphi 0, %s70
      %s73 = sphi 0, %s72
      %s87 = sphi 0, %s73
      %s91 = sphi 0, %s91
      %s93 = sphi 0, %s91
      %s94 = sphi 0, %s93
      %s108 = sphi 0, %s94
      %s112 = sphi 0, %s112
      %s114 = sphi 0, %s112
      %s115 = sphi 0, %s114
      %s129 = sphi 0, %s115
      %s135 = sphi 0, %s137
      %s138 = sphi 0, %s135
      %s139 = sphi 0, %s138
      %s155 = sphi 0, %s139
    $region4: #{tpu_custom_call.1} parent=1 // loop_header_branch
      %18 = sbr.rel (%p16) target = $region8
    $region5: #{tpu_custom_call.1} parent=1 // loop_body
      %s20 = ssub.s32 %s15, 1
      %s21 = ssub.s32 %s15, 2
      %s22 = sadd.s32 %s15, 1
      %s23 = ssub.s32 %s15, %s22
      %p24 = scmp.eq.s32.totalorder %s23, 0
      %s26 = sadd.s32 %s25, 1
      %s27 = scalar_select %p24, %s25, %s26
      %p30 = pneg %p24
      %p31 = scmp.eq.s32.totalorder %s15, 3
      %p32 = por %p30, %p31
      %p33 = scmp.ne.s32.totalorder %s25, %s28
      %p34 = scmp.eq.s32.totalorder %s15, 0
      %p35 = por %p33, %p34
      %p36 = scmp.ne.s32.totalorder %s25, %s28
      %p37 = scmp.eq.s32.totalorder %s20, 3
      %p38 = por %p36, %p37
      %p39 = scmp.ne.s32.totalorder %s28, %s29
      %p40 = scmp.eq.s32.totalorder %s20, 0
      %p41 = por %p39, %p40
      %p42 = scmp.ne.s32.totalorder %s28, %s29
      %p43 = scmp.eq.s32.totalorder %s21, 3
      %p44 = por %p42, %p43
      %p46 = scmp.ne.s32.totalorder %s29, %s45
      %p47 = scmp.eq.s32.totalorder %s21, 0
      %p48 = por %p46, %p47
      %s50 = sadd.s32 %s49, 1
      %p53 = scmp.eq.s32.totalorder %s15, 3
      %p54 = scmp.ne.s32.totalorder %s49, %s51
      %p55 = scmp.eq.s32.totalorder %s15, 0
      %p56 = por %p54, %p55
      %p57 = scmp.ne.s32.totalorder %s49, %s51
      %p58 = scmp.eq.s32.totalorder %s20, 3
      %p59 = por %p57, %p58
      %p60 = scmp.ne.s32.totalorder %s51, %s52
      %p61 = scmp.eq.s32.totalorder %s20, 0
      %p62 = por %p60, %p61
      %p63 = scmp.ne.s32.totalorder %s51, %s52
      %p64 = scmp.eq.s32.totalorder %s21, 3
      %p65 = por %p63, %p64
      %p67 = scmp.ne.s32.totalorder %s52, %s66
      %p68 = scmp.eq.s32.totalorder %s21, 0
      %p69 = por %p67, %p68
      %s71 = sadd.s32 %s70, 1
      %p74 = scmp.eq.s32.totalorder %s15, 3
      %p75 = scmp.ne.s32.totalorder %s70, %s72
      %p76 = scmp.eq.s32.totalorder %s15, 0
      %p77 = por %p75, %p76
      %p78 = scmp.ne.s32.totalorder %s70, %s72
      %p79 = scmp.eq.s32.totalorder %s20, 3
      %p80 = por %p78, %p79
      %p81 = scmp.ne.s32.totalorder %s72, %s73
      %p82 = scmp.eq.s32.totalorder %s20, 0
      %p83 = por %p81, %p82
      %p84 = scmp.ne.s32.totalorder %s72, %s73
      %p85 = scmp.eq.s32.totalorder %s21, 3
      %p86 = por %p84, %p85
      %p88 = scmp.ne.s32.totalorder %s73, %s87
      %p89 = scmp.eq.s32.totalorder %s21, 0
      %p90 = por %p88, %p89
      %s92 = sadd.s32 %s91, 1
      %p95 = scmp.eq.s32.totalorder %s15, 3
      %p96 = scmp.ne.s32.totalorder %s91, %s93
      %p97 = scmp.eq.s32.totalorder %s15, 0
      %p98 = por %p96, %p97
      %p99 = scmp.ne.s32.totalorder %s91, %s93
      %p100 = scmp.eq.s32.totalorder %s20, 3
      %p101 = por %p99, %p100
      %p102 = scmp.ne.s32.totalorder %s93, %s94
      %p103 = scmp.eq.s32.totalorder %s20, 0
      %p104 = por %p102, %p103
      %p105 = scmp.ne.s32.totalorder %s93, %s94
      %p106 = scmp.eq.s32.totalorder %s21, 3
      %p107 = por %p105, %p106
      %p109 = scmp.ne.s32.totalorder %s94, %s108
      %p110 = scmp.eq.s32.totalorder %s21, 0
      %p111 = por %p109, %p110
      %s113 = sadd.s32 %s112, 1
      %p116 = scmp.eq.s32.totalorder %s15, 3
      %p117 = scmp.ne.s32.totalorder %s112, %s114
      %p118 = scmp.eq.s32.totalorder %s15, 0
      %p119 = por %p117, %p118
      %p120 = scmp.ne.s32.totalorder %s112, %s114
      %p121 = scmp.eq.s32.totalorder %s20, 3
      %p122 = por %p120, %p121
      %p123 = scmp.ne.s32.totalorder %s114, %s115
      %p124 = scmp.eq.s32.totalorder %s20, 0
      %p125 = por %p123, %p124
      %p126 = scmp.ne.s32.totalorder %s114, %s115
      %p127 = scmp.eq.s32.totalorder %s21, 3
      %p128 = por %p126, %p127
      %p130 = scmp.ne.s32.totalorder %s115, %s129
      %p131 = scmp.eq.s32.totalorder %s21, 0
      %p132 = por %p130, %p131
      %s133 = ssub.s32 %s15, %s22
      %p134 = scmp.eq.s32.totalorder %s133, 0
      %s136 = sadd.s32 %s135, 1
      %s137 = scalar_select %p134, %s135, %s136
      %p140 = pneg %p134
      %p141 = scmp.eq.s32.totalorder %s15, 3
      %p142 = por %p140, %p141
      %p143 = scmp.ne.s32.totalorder %s135, %s138
      %p144 = scmp.eq.s32.totalorder %s15, 0
      %p145 = por %p143, %p144
      %p146 = scmp.ne.s32.totalorder %s135, %s138
      %p147 = scmp.eq.s32.totalorder %s20, 3
      %p148 = por %p146, %p147
      %p149 = scmp.ne.s32.totalorder %s138, %s139
      %p150 = scmp.eq.s32.totalorder %s20, 0
      %p151 = por %p149, %p150
      %p152 = scmp.ne.s32.totalorder %s138, %s139
      %p153 = scmp.eq.s32.totalorder %s21, 3
      %p154 = por %p152, %p153
      %p156 = scmp.ne.s32.totalorder %s139, %s155
      %p157 = scmp.eq.s32.totalorder %s21, 0
      %p158 = por %p156, %p157
      %p159 = scmp.le.s32.totalorder 1, %s15
      %p160 = scmp.lt.s32.totalorder %s15, 5
      %p161 = pnand %p159, %p160
      %p162 = pneg %p161
      // Predicated region
      $region9: #{tpu_custom_call.1} parent=5 // pred_check
        _
      $region10: #{tpu_custom_call.1} parent=5 // pred_check_branch
        %164 = sbr.rel (%p161) target = $region12
      $region11: #{tpu_custom_call.1} parent=5 // pred_region
        %s165 = ssub.s32 %s15, 1
        // Predicated region
        $region13: #{tpu_custom_call.1} parent=11 // pred_check
          %p166 = pneg %p62
        $region14: #{tpu_custom_call.1} parent=11 // pred_check_branch
          %168 = sbr.rel (%p166) target = $region16
        $region15: #{tpu_custom_call.1} parent=11 // pred_region
          %s170 = ssub.s32 1536, 1536
          %171 = vsyncadd [#allocation3], %s170
          %s172 = sshll.u32 [#allocation2], 4
          %s173 = int_to_ptr.vmem [resolvable:$true] %s172
          %178 = dma.hbm_to_vmem [thread:$0]  %s1, 1536, %s173, [#allocation3], 256, 256, 16
        $region16: #{tpu_custom_call.1} parent=11 // pred_fallthru
          _
        // Predicated region
        $region17: #{tpu_custom_call.1} parent=11 // pred_check
          %p179 = pneg %p83
        $region18: #{tpu_custom_call.1} parent=11 // pred_check_branch
          %181 = sbr.rel (%p179) target = $region20
        $region19: #{tpu_custom_call.1} parent=11 // pred_region
          _
        $region20: #{tpu_custom_call.1} parent=11 // pred_fallthru
          _
        // Predicated region
        $region21: #{tpu_custom_call.1} parent=11 // pred_check
          %p182 = pneg %p104
        $region22: #{tpu_custom_call.1} parent=11 // pred_check_branch
          %184 = sbr.rel (%p182) target = $region24
        $region23: #{tpu_custom_call.1} parent=11 // pred_region
          _
        $region24: #{tpu_custom_call.1} parent=11 // pred_fallthru
          _
        // Predicated region
        $region25: #{tpu_custom_call.1} parent=11 // pred_check
          %p185 = pneg %p125
        $region26: #{tpu_custom_call.1} parent=11 // pred_check_branch
          %187 = sbr.rel (%p185) target = $region28
        $region27: #{tpu_custom_call.1} parent=11 // pred_region
          _
        $region28: #{tpu_custom_call.1} parent=11 // pred_fallthru
          _
      $region12: #{tpu_custom_call.1} parent=5 // pred_fallthru
        _
      %p188 = scmp.lt.s32.totalorder %s15, 4
      // Predicated region
      $region29: #{tpu_custom_call.1} parent=5 // pred_check
        %p189 = pneg %p188
      $region30: #{tpu_custom_call.1} parent=5 // pred_check_branch
        %191 = sbr.rel (%p189) target = $region32
      $region31: #{tpu_custom_call.1} parent=5 // pred_region
        // Predicated region
        $region33: #{tpu_custom_call.1} parent=31 // pred_check
          %p192 = pneg %p35
        $region34: #{tpu_custom_call.1} parent=31 // pred_check_branch
          %194 = sbr.rel (%p192) target = $region36
        $region35: #{tpu_custom_call.1} parent=31 // pred_region
          %s195 = smul.u32 4, %s15
          %p196 = scmp.lt.s32.totalorder %s195, 15
          %s197 = scalar_select %p196, %s195, 15
          %s198 = smul.addr %s197, 4
          %s199 = scalar_lea.vmem %s0, %s198
          %s200 = smul.u32 4, %s15
        $region36: #{tpu_custom_call.1} parent=31 // pred_fallthru
          _
      $region32: #{tpu_custom_call.1} parent=5 // pred_fallthru
        _
      %p201 = scmp.le.s32.totalorder 1, %s15
      %p202 = scmp.lt.s32.totalorder %s15, 5
      %p203 = pnand %p201, %p202
      %p204 = pneg %p203
      // Predicated region
      $region37: #{tpu_custom_call.1} parent=5 // pred_check
        _
      $region38: #{tpu_custom_call.1} parent=5 // pred_check_branch
        %206 = sbr.rel (%p203) target = $region40
      $region39: #{tpu_custom_call.1} parent=5 // pred_region
        %s207 = ssub.s32 %s15, 1
        // Predicated region
        $region41: #{tpu_custom_call.1} parent=39 // pred_check
          %p208 = pneg %p62
        $region42: #{tpu_custom_call.1} parent=39 // pred_check_branch
          %210 = sbr.rel (%p208) target = $region44
        $region43: #{tpu_custom_call.1} parent=39 // pred_region
          %211 = dma.done [#allocation3], 1536
        $region44: #{tpu_custom_call.1} parent=39 // pred_fallthru
          _
        %s212 = smul.u32 4, %s20
        %p213 = scmp.lt.s32.totalorder %s212, 15
        %s214 = scalar_select %p213, %s212, 15
        %s215 = smul.addr %s214, 4
        %s216 = scalar_lea.vmem %s0, %s215
        %p217 = pneg %p41
        %p218 = pneg %p38
        %p219 = pneg %p62
        %p220 = pneg %p59
        %p221 = pneg %p83
        %p222 = pneg %p80
        %p223 = pneg %p104
        %p224 = pneg %p101
        %p225 = pneg %p125
        %p226 = pneg %p122
        %p227 = pneg %p151
        %p228 = pneg %p148
        %s229 = sand.u32 %s138, 1
        %s230 = scalar_lea.sflag [#allocation4], %s229
        %s231 = sand.u32 %s138, 1
        %s232 = smul.addr %s231, 32
        %s233 = scalar_lea.vmem [#allocation5], %s232
        %s234 = smul.u32 4, %s20
        %p235 = scmp.lt.s32.totalorder %s234, 15
        %s236 = scalar_select %p235, %s234, 15
        %s237 = smul.addr %s236, 4
        %s238 = scalar_lea.vmem %s0, %s237
        %s239 = smul.u32 4, %s20
        %s240 = smul.u32 4, %s20
        %v242 = vld [vmem:[%s238] sm:$0xf]
        %v243 = vld [vmem:[%s238 + $0x4] sm:$0xf]
        %v244 = vld [vmem:[%s238 + $0x8] sm:$0xf]
        %v245 = vld [vmem:[%s238 + $0xc] sm:$0xf]
        %v246 = vld [vmem:[#allocation2] sm:$0xff]
        %v247 = vld [vmem:[#allocation2 + $0x8] sm:$0xff]
        %v248 = vld [vmem:[#allocation2 + $0x10] sm:$0xff]
        %v249 = vld [vmem:[#allocation2 + $0x18] sm:$0xff]
        %v250 = vld [vmem:[#allocation2 + $0x20] sm:$0xff]
        %v251 = vld [vmem:[#allocation2 + $0x28] sm:$0xff]
        %v252 = vld [vmem:[#allocation2 + $0x30] sm:$0xff]
        %v253 = vld [vmem:[#allocation2 + $0x38] sm:$0xff]
        %v254 = vld [vmem:[#allocation2 + $0x40] sm:$0xff]
        %v255 = vld [vmem:[#allocation2 + $0x48] sm:$0xff]
        %v256 = vld [vmem:[#allocation2 + $0x50] sm:$0xff]
        %v257 = vld [vmem:[#allocation2 + $0x58] sm:$0xff]
        %v262 = vunpack.c.l.b16 %v242
        %v263 = vunpack.c.l.b16 %v243
        %v264 = vunpack.c.l.b16 %v244
        %v265 = vunpack.c.l.b16 %v245
        %v266 = vpack.c.b16 %v263, %v262
        %v267 = vpack.c.b16 %v265, %v264
        %v280 = vunpack.c.l.b16 %v246
        %v281 = vunpack.c.h.b16 %v246
        %v282 = vunpack.c.l.b16 %v247
        %v283 = vunpack.c.h.b16 %v247
        %v284 = vunpack.c.l.b16 %v248
        %v285 = vunpack.c.h.b16 %v248
        %v286 = vunpack.c.l.b16 %v249
        %v287 = vunpack.c.h.b16 %v249
        %v288 = vunpack.c.l.b16 %v250
        %v289 = vunpack.c.h.b16 %v250
        %v290 = vunpack.c.l.b16 %v251
        %v291 = vunpack.c.h.b16 %v251
        %v292 = vunpack.c.l.b16 %v252
        %v293 = vunpack.c.h.b16 %v252
        %v294 = vunpack.c.l.b16 %v253
        %v295 = vunpack.c.h.b16 %v253
        %v296 = vunpack.c.l.b16 %v254
        %v297 = vunpack.c.h.b16 %v254
        %v298 = vunpack.c.l.b16 %v255
        %v299 = vunpack.c.h.b16 %v255
        %v300 = vunpack.c.l.b16 %v256
        %v301 = vunpack.c.h.b16 %v256
        %v302 = vunpack.c.l.b16 %v257
        %v303 = vunpack.c.h.b16 %v257
        %v304 = vpack.c.b16 %v284, %v280
        %v305 = vpack.c.b16 %v285, %v281
        %v306 = vpack.c.b16 %v286, %v282
        %v307 = vpack.c.b16 %v287, %v283
        %v308 = vpack.c.b16 %v292, %v288
        %v309 = vpack.c.b16 %v293, %v289
        %v310 = vpack.c.b16 %v294, %v290
        %v311 = vpack.c.b16 %v295, %v291
        %v312 = vpack.c.b16 %v300, %v296
        %v313 = vpack.c.b16 %v301, %v297
        %v314 = vpack.c.b16 %v302, %v298
        %v315 = vpack.c.b16 %v303, %v299
        %vm328 = vcmask 392192
        %v330 = vsel %vm328, %v266, 0
        %v333 = vsel %vm328, %v267, 0
        %335 = vmatprep.subr.bf16.mxu0 %v305
        %336 = vmatpush1.bf16.msra.mxu0 %v304
        %337 = vmatprep.subr.bf16.mxu0 %v309
        %338 = vmatpush1.bf16.msra.mxu0 %v308
        %339 = vmatprep.subr.bf16.mxu0 %v313
        %340 = vmatpush1.bf16.msra.mxu0 %v312
        %341 = vmatprep.subr.bf16.mxu0 0
        %342 = vmatpush1.bf16.msra.mxu0 0
        %343 = vmatprep.subr.bf16.mxu0 0
        %344 = vmatpush1.bf16.msra.mxu0 0
        %345 = vmatprep.subr.bf16.mxu0 0
        %346 = vmatpush1.bf16.msra.mxu0 0
        %347 = vmatprep.subr.bf16.mxu0 0
        %348 = vmatpush1.bf16.msra.mxu0 0
        %349 = vmatprep.subr.bf16.mxu0 0
        %350 = vmatpush1.bf16.msra.mxu0 0
        %351 = vmatprep.subr.bf16.mxu0 0
        %352 = vmatpush1.bf16.msra.mxu0 0
        %353 = vmatprep.subr.bf16.mxu0 0
        %354 = vmatpush1.bf16.msra.mxu0 0
        %355 = vmatprep.subr.bf16.mxu0 0
        %356 = vmatpush1.bf16.msra.mxu0 0
        %357 = vmatprep.subr.bf16.mxu0 0
        %358 = vmatpush1.bf16.msra.mxu0 0
        %359 = vmatprep.subr.bf16.mxu0 0
        %360 = vmatpush1.bf16.msra.mxu0 0
        %361 = vmatprep.subr.bf16.mxu0 0
        %362 = vmatpush1.bf16.msra.mxu0 0
        %363 = vmatprep.subr.bf16.mxu0 0
        %364 = vmatpush1.bf16.msra.mxu0 0
        %365 = vmatprep.subr.bf16.mxu0 0
        %366 = vmatpush1.bf16.msra.mxu0 0
        %367 = vmatprep.mubr.bf16.mxu0 0
        %368 = vmatmul.mubr.bf16.gmra.mrb[0].mxu0 %v330
        %v369 = vpop.f32.mrb[0].mxu0
        %v370 = vadd.f32 0.0, %v369
        %v371 = vpop.f32.mrb[0].mxu0
        %v372 = vadd.f32 0.0, %v371
        %v373 = vpop.f32.mrb[0].mxu0
        %v374 = vadd.f32 0.0, %v373
        %v375 = vpop.f32.mrb[0].mxu0
        %v376 = vadd.f32 0.0, %v375
        %377 = vmatprep.mubr.bf16.mxu0 0
        %378 = vmatmul.mubr.bf16.gmra.mrb[0].mxu0 %v333
        %v379 = vpop.f32.mrb[0].mxu0
        %v380 = vadd.f32 0.0, %v379
        %v381 = vpop.f32.mrb[0].mxu0
        %v382 = vadd.f32 0.0, %v381
        %v383 = vpop.f32.mrb[0].mxu0
        %v384 = vadd.f32 0.0, %v383
        %v385 = vpop.f32.mrb[0].mxu0
        %v386 = vadd.f32 0.0, %v385
        %387 = vdwg.mxu0
        %388 = vmatprep.subr.bf16.mxu0 %v307
        %389 = vmatpush1.bf16.msra.mxu0 %v306
        %390 = vmatprep.subr.bf16.mxu0 %v311
        %391 = vmatpush1.bf16.msra.mxu0 %v310
        %392 = vmatprep.subr.bf16.mxu0 %v315
        %393 = vmatpush1.bf16.msra.mxu0 %v314
        %394 = vmatprep.subr.bf16.mxu0 0
        %395 = vmatpush1.bf16.msra.mxu0 0
        %396 = vmatprep.subr.bf16.mxu0 0
        %397 = vmatpush1.bf16.msra.mxu0 0
        %398 = vmatprep.subr.bf16.mxu0 0
        %399 = vmatpush1.bf16.msra.mxu0 0
        %400 = vmatprep.subr.bf16.mxu0 0
        %401 = vmatpush1.bf16.msra.mxu0 0
        %402 = vmatprep.subr.bf16.mxu0 0
        %403 = vmatpush1.bf16.msra.mxu0 0
        %404 = vmatprep.subr.bf16.mxu0 0
        %405 = vmatpush1.bf16.msra.mxu0 0
        %406 = vmatprep.subr.bf16.mxu0 0
        %407 = vmatpush1.bf16.msra.mxu0 0
        %408 = vmatprep.subr.bf16.mxu0 0
        %409 = vmatpush1.bf16.msra.mxu0 0
        %410 = vmatprep.subr.bf16.mxu0 0
        %411 = vmatpush1.bf16.msra.mxu0 0
        %412 = vmatprep.subr.bf16.mxu0 0
        %413 = vmatpush1.bf16.msra.mxu0 0
        %414 = vmatprep.subr.bf16.mxu0 0
        %415 = vmatpush1.bf16.msra.mxu0 0
        %416 = vmatprep.subr.bf16.mxu0 0
        %417 = vmatpush1.bf16.msra.mxu0 0
        %418 = vmatprep.subr.bf16.mxu0 0
        %419 = vmatpush1.bf16.msra.mxu0 0
        %420 = vmatprep.mubr.bf16.mxu0 0
        %421 = vmatmul.mubr.bf16.gmra.mrb[0].mxu0 %v330
        %v422 = vpop.f32.mrb[0].mxu0
        %v423 = vadd.f32 0.0, %v422
        %v424 = vpop.f32.mrb[0].mxu0
        %v425 = vadd.f32 0.0, %v424
        %v426 = vpop.f32.mrb[0].mxu0
        %v427 = vadd.f32 0.0, %v426
        %v428 = vpop.f32.mrb[0].mxu0
        %v429 = vadd.f32 0.0, %v428
        %430 = vmatprep.mubr.bf16.mxu0 0
        %431 = vmatmul.mubr.bf16.gmra.mrb[0].mxu0 %v333
        %v432 = vpop.f32.mrb[0].mxu0
        %v433 = vadd.f32 0.0, %v432
        %v434 = vpop.f32.mrb[0].mxu0
        %v435 = vadd.f32 0.0, %v434
        %v436 = vpop.f32.mrb[0].mxu0
        %v437 = vadd.f32 0.0, %v436
        %v438 = vpop.f32.mrb[0].mxu0
        %v439 = vadd.f32 0.0, %v438
        %440 = vdwg.mxu0
        %v441 = vmax.f32 %v370, %v372
        %v442 = vmax.f32 %v374, %v376
        %v443 = vmax.f32 %v380, %v382
        %v444 = vmax.f32 %v384, %v386
        %v445 = vmax.f32 %v423, %v425
        %v446 = vmax.f32 %v427, %v429
        %v447 = vmax.f32 %v433, %v435
        %v448 = vmax.f32 %v437, %v439
        %v449 = vmax.f32 %v441, %v445
        %v450 = vmax.f32 %v442, %v446
        %v451 = vmax.f32 %v443, %v447
        %v452 = vmax.f32 %v444, %v448
        %v453 = vld [vmem:[%s2] sm:$0x1]
        %v455 = vlaneseq
        %v456 = vshrl.u32 %v455, 7
        %v457 = vsub.s32 0, %v456
        %v458 = vrot.slane %v453, %v457
        %v460 = vadd.f32 %v449, %v458
        %v461 = vadd.f32 %v450, %v458
        %v462 = vadd.f32 %v451, %v458
        %v463 = vadd.f32 %v452, %v458
        %v464 = vmax.f32 %v460, 0.0
        %v465 = vmax.f32 %v461, 0.0
        %v466 = vmax.f32 %v462, 0.0
        %v467 = vmax.f32 %v463, 0.0
        %v468 = vpack.c.bf16 %v465, %v464
        %v469 = vpack.c.bf16 %v467, %v466
        %v470 = vld [vmem:[%s3] sm:$0xf]
        %v471 = vld [vmem:[%s3 + $0x4] sm:$0xf]
        %v472 = vld [vmem:[%s3 + $0x8] sm:$0xf]
        %v473 = vld [vmem:[%s3 + $0xc] sm:$0xf]
        %v474 = vld [vmem:[%s3 + $0x10] sm:$0xf]
        %v475 = vld [vmem:[%s3 + $0x14] sm:$0xf]
        %v476 = vld [vmem:[%s3 + $0x18] sm:$0xf]
        %v477 = vld [vmem:[%s3 + $0x1c] sm:$0xf]
        %v478 = vld [vmem:[%s3 + $0x20] sm:$0xf]
        %v479 = vld [vmem:[%s3 + $0x24] sm:$0xf]
        %v480 = vld [vmem:[%s3 + $0x28] sm:$0xf]
        %v481 = vld [vmem:[%s3 + $0x2c] sm:$0xf]
        %v482 = vld [vmem:[%s3 + $0x30] sm:$0xf]
        %v483 = vld [vmem:[%s3 + $0x34] sm:$0xf]
        %v484 = vld [vmem:[%s3 + $0x38] sm:$0xf]
        %v485 = vld [vmem:[%s3 + $0x3c] sm:$0xf]
        %v486 = vld [vmem:[%s4] sm:$0x1]
        %v488 = vlaneseq
        %v489 = vshrl.u32 %v488, 7
        %v490 = vsub.s32 0, %v489
        %v491 = vrot.slane %v486, %v490
        %v509 = vunpack.c.l.b16 %v470
        %v510 = vunpack.c.l.b16 %v471
        %v511 = vunpack.c.l.b16 %v472
        %v512 = vunpack.c.l.b16 %v473
        %v513 = vunpack.c.l.b16 %v474
        %v514 = vunpack.c.l.b16 %v475
        %v515 = vunpack.c.l.b16 %v476
        %v516 = vunpack.c.l.b16 %v477
        %v517 = vunpack.c.l.b16 %v478
        %v518 = vunpack.c.l.b16 %v479
        %v519 = vunpack.c.l.b16 %v480
        %v520 = vunpack.c.l.b16 %v481
        %v521 = vunpack.c.l.b16 %v482
        %v522 = vunpack.c.l.b16 %v483
        %v523 = vunpack.c.l.b16 %v484
        %v524 = vunpack.c.l.b16 %v485
        %v525 = vpack.c.b16 %v510, %v509
        %v526 = vpack.c.b16 %v512, %v511
        %v527 = vpack.c.b16 %v514, %v513
        %v528 = vpack.c.b16 %v516, %v515
        %v529 = vpack.c.b16 %v518, %v517
        %v530 = vpack.c.b16 %v520, %v519
        %v531 = vpack.c.b16 %v522, %v521
        %v532 = vpack.c.b16 %v524, %v523
        %541 = vmatprep.subr.bf16.mxu0 0
        %542 = vmatpush1.bf16.msra.mxu0 %v525
        %543 = vmatprep.subr.bf16.mxu0 0
        %544 = vmatpush1.bf16.msra.mxu0 %v526
        %545 = vmatprep.subr.bf16.mxu0 0
        %546 = vmatpush1.bf16.msra.mxu0 %v527
        %547 = vmatprep.subr.bf16.mxu0 0
        %548 = vmatpush1.bf16.msra.mxu0 %v528
        %549 = vmatprep.subr.bf16.mxu0 0
        %550 = vmatpush1.bf16.msra.mxu0 %v529
        %551 = vmatprep.subr.bf16.mxu0 0
        %552 = vmatpush1.bf16.msra.mxu0 %v530
        %553 = vmatprep.subr.bf16.mxu0 0
        %554 = vmatpush1.bf16.msra.mxu0 %v531
        %555 = vmatprep.subr.bf16.mxu0 0
        %556 = vmatpush1.bf16.msra.mxu0 %v532
        %557 = vmatprep.subr.bf16.mxu0 0
        %558 = vmatpush1.bf16.msra.mxu0 0
        %559 = vmatprep.subr.bf16.mxu0 0
        %560 = vmatpush1.bf16.msra.mxu0 0
        %561 = vmatprep.subr.bf16.mxu0 0
        %562 = vmatpush1.bf16.msra.mxu0 0
        %563 = vmatprep.subr.bf16.mxu0 0
        %564 = vmatpush1.bf16.msra.mxu0 0
        %565 = vmatprep.subr.bf16.mxu0 0
        %566 = vmatpush1.bf16.msra.mxu0 0
        %567 = vmatprep.subr.bf16.mxu0 0
        %568 = vmatpush1.bf16.msra.mxu0 0
        %569 = vmatprep.subr.bf16.mxu0 0
        %570 = vmatpush1.bf16.msra.mxu0 0
        %571 = vmatprep.subr.bf16.mxu0 0
        %572 = vmatpush1.bf16.msra.mxu0 0
        %573 = vmatprep.mubr.bf16.mxu0 0
        %574 = vmatmul.mubr.bf16.gmra.mrb[0].mxu0 %v468
        %v575 = vpop.f32.mrb[0].mxu0
        %v576 = vadd.f32 %v491, %v575
        %v577 = vpop.f32.mrb[0].mxu0
        %v578 = vpop.f32.mrb[0].mxu0
        %v579 = vadd.f32 %v491, %v578
        %v580 = vpop.f32.mrb[0].mxu0
        %581 = vmatprep.mubr.bf16.mxu0 0
        %582 = vmatmul.mubr.bf16.gmra.mrb[0].mxu0 %v469
        %v583 = vpop.f32.mrb[0].mxu0
        %v584 = vadd.f32 %v491, %v583
        %v585 = vpop.f32.mrb[0].mxu0
        %v586 = vpop.f32.mrb[0].mxu0
        %v587 = vadd.f32 %v491, %v586
        %v588 = vpop.f32.mrb[0].mxu0
        %589 = vdwg.mxu0
        %590 = vst [vmem:[%s233] sm:$0xff] %v576
        %591 = vst [vmem:[%s233 + $0x8] sm:$0xff] %v579
        %592 = vst [vmem:[%s233 + $0x10] sm:$0xff] %v584
        %593 = vst [vmem:[%s233 + $0x18] sm:$0xff] %v587
        %s594 = sand.u32 %s138, 1
        %s595 = scalar_lea.sflag [#allocation4], %s594
        %s596 = sand.u32 %s138, 1
        %s597 = smul.addr %s596, 32
        %s598 = scalar_lea.vmem [#allocation5], %s597
        // Predicated region
        $region45: #{tpu_custom_call.1} parent=39 // pred_check
          %p599 = pneg %p148
        $region46: #{tpu_custom_call.1} parent=39 // pred_check_branch
          %601 = sbr.rel (%p599) target = $region48
        $region47: #{tpu_custom_call.1} parent=39 // pred_region
          %s602 = smul.u32 4, %s20
          %s604 = ssub.s32 512, 512
          %605 = vsyncadd %s595, %s604
          %s606 = smul.addr %s602, 128
          %s607 = scalar_lea.hbm %s5, %s606
          %s608 = sshll.u32 %s598, 4
          %s609 = int_to_ptr.vmem [resolvable:$true] %s608
          %614 = dma.vmem_to_hbm [thread:$0]  %s609, 512, %s607, %s595, 128, 128, 8
        $region48: #{tpu_custom_call.1} parent=39 // pred_fallthru
          _
      $region40: #{tpu_custom_call.1} parent=5 // pred_fallthru
        _
      %p615 = scmp.le.s32.totalorder 2, %s15
      // Predicated region
      $region49: #{tpu_custom_call.1} parent=5 // pred_check
        %p616 = pneg %p615
      $region50: #{tpu_custom_call.1} parent=5 // pred_check_branch
        %618 = sbr.rel (%p616) target = $region52
      $region51: #{tpu_custom_call.1} parent=5 // pred_region
        %s619 = ssub.s32 %s15, 2
        // Predicated region
        $region53: #{tpu_custom_call.1} parent=51 // pred_check
          %p620 = pneg %p154
        $region54: #{tpu_custom_call.1} parent=51 // pred_check_branch
          %622 = sbr.rel (%p620) target = $region56
        $region55: #{tpu_custom_call.1} parent=51 // pred_region
          %s623 = sand.u32 %s139, 1
          %s624 = scalar_lea.sflag [#allocation4], %s623
          %s625 = sand.u32 %s139, 1
          %s626 = smul.addr %s625, 32
          %s627 = scalar_lea.vmem [#allocation5], %s626
          %628 = dma.done %s624, 512
        $region56: #{tpu_custom_call.1} parent=51 // pred_fallthru
          _
      $region52: #{tpu_custom_call.1} parent=5 // pred_fallthru
        _
    $region6: #{tpu_custom_call.1} parent=1 // loop_footer
      %s19 = sadd.s32 1, %s15
    $region7: #{tpu_custom_call.1} parent=1 // loop_footer_branch
      %14 = sbr.rel target = $region3
    $region8: #{tpu_custom_call.1} parent=1 // loop_exit
      _
    %629 = vsyncpa [#allocation3], 1
    %s630 = scalar_lea.sflag [#allocation3], 1
    %631 = vsyncpa %s630, 1
    %632 = vsyncpa [#allocation4], 1
    %s633 = scalar_lea.sflag [#allocation4], 1
    %634 = vsyncpa %s633, 1

</llo_original>
